<compile_context>
chip_gen: v7x
topology: tpu7x:2x2x1
jax: 0.10.0
libtpu: 0.0.40
codegen_flags: <defaults>
</compile_context>

<pallas_src>
import jax
import jax.numpy as jnp
from jax.experimental import pallas as pl
from jax.experimental.pallas import tpu as pltpu

_LANE = 128      # lane width (last-dim alignment target for padded dims)
_SUBLANE = 8     # sublane width (second-to-last dim alignment)


def _round_up(n: int, m: int) -> int:
    return ((n + m - 1) // m) * m


def _mlp_kernel(x_ref, w1_ref, b1_ref, w2_ref, b2_ref, o_ref):
    # x : (Bt, d_in)   f32  -> cast to bf16 in-kernel (VPU, hidden under DMA)
    # w1: (d_in, H_p)  bf16   b1: (1, H_p)   f32
    # w2: (H_p, d_out) bf16   b2: (1, d_out) f32
    # o : (Bt, d_out)  f32
    x = x_ref[...].astype(jnp.bfloat16)
    h = jnp.dot(x, w1_ref[...], preferred_element_type=jnp.float32)
    h = jnp.maximum(h + b1_ref[...], 0.0)                    # bias + ReLU (f32)
    y = jnp.dot(h.astype(jnp.bfloat16), w2_ref[...],
                preferred_element_type=jnp.float32)
    o_ref[...] = jnp.maximum(y + b2_ref[...], 0.0)            # bias + ReLU (f32)


def mnist_nonlinear_forward(x, w1, b1, w2, b2, *, block_b: int = 2048):
    """x: (B, C, H, W) float32. w1: (d_in, hidden), w2: (hidden, d_out).

    Returns (B, d_out) float32 = ReLU(ReLU(flatten(x) @ w1 + b1) @ w2 + b2).
    """
    b = x.shape[0]
    x_flat = x.reshape(b, -1).astype(jnp.float32)              # nn.Flatten
    d_in = x_flat.shape[1]
    hidden = w1.shape[1]
    d_out = w2.shape[1]
    assert w1.shape == (d_in, hidden)
    assert w2.shape == (hidden, d_out)

    # Pad only the hidden dim to a full lane width (cheap: weights are DMA'd
    # once and stay VMEM-resident). d_in and d_out stay at their true sizes —
    # full-array block dims are legal and avoid padded HBM traffic on the two
    # streamed arrays (x and out). Padded hidden columns are inert: zero dot
    # output + zero bias -> ReLU(0)=0 -> multiplied by zero-padded w2 K-rows.
    hid_p = _round_up(hidden, _LANE)

    w1p = jnp.pad(w1, ((0, 0), (0, hid_p - hidden))).astype(jnp.bfloat16)
    b1p = jnp.pad(b1.reshape(1, hidden),
                  ((0, 0), (0, hid_p - hidden))).astype(jnp.float32)
    w2p = jnp.pad(w2, ((0, hid_p - hidden), (0, 0))).astype(jnp.bfloat16)
    b2p = b2.reshape(1, d_out).astype(jnp.float32)

    if b <= block_b:
        # Small batch: single no-grid call, whole problem VMEM-resident.
        # No per-step pipeline overhead, no double-buffered windows.
        b_pad = _round_up(max(b, _SUBLANE), _SUBLANE)
        xp = jnp.pad(x_flat, ((0, b_pad - b), (0, 0)))
        out = pl.pallas_call(
            _mlp_kernel,
            out_shape=jax.ShapeDtypeStruct((b_pad, d_out), jnp.float32),
        )(xp, w1p, b1p, w2p, b2p)
    else:
        # Large batch: tile over batch only. Weights/biases get constant block
        # indices (VMEM-resident, DMA'd once); batch axis is "parallel" so it
        # shards across v7x's two TensorCores.
        nb = pl.cdiv(b, block_b)
        if nb > 1 and nb % 2 == 1:
            nb += 1                      # even split across 2 TCs (v7x)
        block_b_eff = _round_up(pl.cdiv(b, nb), _SUBLANE)
        b_pad = nb * block_b_eff         # padding bounded by nb*8 rows
        xp = jnp.pad(x_flat, ((0, b_pad - b), (0, 0)))

        # VMEM budget: double-buffered x/out tiles + weights (+ headroom).
        # Covers v5e's 16 MiB scoped default; stays well under v7x's 64 MiB.
        bytes_x = block_b_eff * d_in * 4
        bytes_out = block_b_eff * d_out * 4
        bytes_w = d_in * hid_p * 2 + hid_p * d_out * 2 + (hid_p + d_out) * 4
        vmem_need = 2 * (bytes_x + bytes_out + bytes_w) + (4 << 20)
        vmem_limit = int(min(max(vmem_need, 32 << 20), 48 << 20))

        cost = pl.CostEstimate(
            flops=2 * b_pad * (d_in * hid_p + hid_p * d_out),
            transcendentals=0,
            bytes_accessed=(b_pad * d_in * 4 + b_pad * d_out * 4
                            + d_in * hid_p * 2 + hid_p * d_out * 2
                            + (hid_p + d_out) * 4),
        )

        out = pl.pallas_call(
            _mlp_kernel,
            out_shape=jax.ShapeDtypeStruct((b_pad, d_out), jnp.float32),
            grid=(nb,),
            in_specs=[
                pl.BlockSpec((block_b_eff, d_in), lambda i: (i, 0)),
                pl.BlockSpec((d_in, hid_p), lambda i: (0, 0)),
                pl.BlockSpec((1, hid_p), lambda i: (0, 0)),
                pl.BlockSpec((hid_p, d_out), lambda i: (0, 0)),
                pl.BlockSpec((1, d_out), lambda i: (0, 0)),
            ],
            out_specs=pl.BlockSpec((block_b_eff, d_out), lambda i: (i, 0)),
            compiler_params=pltpu.CompilerParams(
                dimension_semantics=("parallel",),
                vmem_limit_bytes=vmem_limit,
            ),
            cost_estimate=cost,
        )(xp, w1p, b1p, w2p, b2p)

    return out[:b]


def init_params(key, input_layer, hidden_layer, output_layer):
    """Deterministic init mimicking nn.Linear's uniform(-1/sqrt(fan_in), +)."""
    k1, k2, k3, k4 = jax.random.split(key, 4)
    bound1 = 1.0 / jnp.sqrt(jnp.float32(input_layer))
    bound2 = 1.0 / jnp.sqrt(jnp.float32(hidden_layer))
    # stored as (in, out) == PyTorch weight.T
    w1 = jax.random.uniform(k1, (input_layer, hidden_layer), jnp.float32,
                            -bound1, bound1)
    b1 = jax.random.uniform(k2, (hidden_layer,), jnp.float32, -bound1, bound1)
    w2 = jax.random.uniform(k3, (hidden_layer, output_layer), jnp.float32,
                            -bound2, bound2)
    b2 = jax.random.uniform(k4, (output_layer,), jnp.float32, -bound2, bound2)
    return w1, b1, w2, b2


def reference_forward(x, w1, b1, w2, b2):
    x_flat = x.reshape(x.shape[0], -1)
    h = jnp.maximum(x_flat @ w1 + b1, 0.0)
    return jnp.maximum(h @ w2 + b2, 0.0)


if __name__ == "__main__":
    key = jax.random.PRNGKey(0)
    kx, kp, kx2, kx3 = jax.random.split(key, 4)

    # Small MNIST-like shapes: batch=8, 1x16x16 images -> input_layer=256
    batch, chans, spatial = 8, 1, 16
    input_layer = chans * spatial * spatial
    hidden_layer = 32
    output_layer = 10

    x = jax.random.normal(kx, (batch, chans, spatial, spatial), jnp.float32)
    w1, b1, w2, b2 = init_params(kp, input_layer, hidden_layer, output_layer)

    # Path 1: small batch -> single no-grid call.
    out = jax.block_until_ready(mnist_nonlinear_forward(x, w1, b1, w2, b2))
    ref = reference_forward(x, w1, b1, w2, b2)
    assert out.shape == (batch, output_layer)
    # bf16 matmul operands (f32 accumulation) -> modest tolerance vs f32 ref.
    assert jnp.allclose(out, ref, atol=5e-2, rtol=5e-2), \
        float(jnp.max(jnp.abs(out - ref)))

    # Path 2: batch-tiled grid (parallel batch axis, weights VMEM-resident).
    big_batch = 256
    xb = jax.random.normal(kx2, (big_batch, chans, spatial, spatial), jnp.float32)
    outb = jax.block_until_ready(
        mnist_nonlinear_forward(xb, w1, b1, w2, b2, block_b=128))
    refb = reference_forward(xb, w1, b1, w2, b2)
    assert outb.shape == (big_batch, output_layer)
    assert jnp.allclose(outb, refb, atol=5e-2, rtol=5e-2), \
        float(jnp.max(jnp.abs(outb - refb)))

    # Path 3: ragged batch -> exercises adaptive block_b / even-nb padding.
    ragged_batch = 200
    xr = jax.random.normal(kx3, (ragged_batch, chans, spatial, spatial),
                           jnp.float32)
    outr = jax.block_until_ready(
        mnist_nonlinear_forward(xr, w1, b1, w2, b2, block_b=64))
    refr = reference_forward(xr, w1, b1, w2, b2)
    assert outr.shape == (ragged_batch, output_layer)
    assert jnp.allclose(outr, refr, atol=5e-2, rtol=5e-2), \
        float(jnp.max(jnp.abs(outr - refr)))

    print("KERNEL_OK")
</pallas_src>

<mosaic_0001>
module attributes {stable_mosaic.version = 11 : i64} {
  func.func @_mlp_kernel(%arg0: memref<8x256xf32, #tpu.memory_space<vmem>>, %arg1: memref<256x128xbf16, #tpu.memory_space<vmem>>, %arg2: memref<1x128xf32, #tpu.memory_space<vmem>>, %arg3: memref<128x10xbf16, #tpu.memory_space<vmem>>, %arg4: memref<1x10xf32, #tpu.memory_space<vmem>>, %arg5: memref<8x10xf32, #tpu.memory_space<vmem>>) attributes {dimension_semantics = [], scalar_prefetch = 0 : i64, scratch_operands = 0 : i64, tpu.core_type = #tpu.core_type<tc>} {
    %c0 = arith.constant 0 : index
    %c0_0 = arith.constant 0 : index
    %0 = vector.load %arg0[%c0, %c0_0] : memref<8x256xf32, #tpu.memory_space<vmem>>, vector<8x256xf32>
    %1 = arith.truncf %0 : vector<8x256xf32> to vector<8x256xbf16>
    %c0_1 = arith.constant 0 : index
    %c0_2 = arith.constant 0 : index
    %2 = vector.load %arg1[%c0_1, %c0_2] : memref<256x128xbf16, #tpu.memory_space<vmem>>, vector<256x128xbf16>
    %cst = arith.constant dense<0.000000e+00> : vector<8x128xf32>
    %3 = tpu.matmul %1, %2, %cst {dimension_numbers = #tpu.dot_dimension_numbers<[1], [0], [0], [1], [0, 0, 1, 1], [], []>} : vector<8x256xbf16>, vector<256x128xbf16>, vector<8x128xf32> -> vector<8x128xf32>
    %c0_3 = arith.constant 0 : index
    %c0_4 = arith.constant 0 : index
    %4 = vector.load %arg2[%c0_3, %c0_4] : memref<1x128xf32, #tpu.memory_space<vmem>>, vector<1x128xf32>
    %5 = vector.broadcast %4 : vector<1x128xf32> to vector<8x128xf32>
    %6 = arith.addf %3, %5 : vector<8x128xf32>
    %cst_5 = arith.constant 0.000000e+00 : f32
    %7 = vector.broadcast %cst_5 : f32 to vector<8x128xf32>
    %8 = arith.maximumf %6, %7 : vector<8x128xf32>
    %9 = arith.truncf %8 : vector<8x128xf32> to vector<8x128xbf16>
    %c0_6 = arith.constant 0 : index
    %c0_7 = arith.constant 0 : index
    %10 = vector.load %arg3[%c0_6, %c0_7] : memref<128x10xbf16, #tpu.memory_space<vmem>>, vector<128x10xbf16>
    %cst_8 = arith.constant dense<0.000000e+00> : vector<8x10xf32>
    %11 = tpu.matmul %9, %10, %cst_8 {dimension_numbers = #tpu.dot_dimension_numbers<[1], [0], [0], [1], [0, 0, 1, 1], [], []>} : vector<8x128xbf16>, vector<128x10xbf16>, vector<8x10xf32> -> vector<8x10xf32>
    %c0_9 = arith.constant 0 : index
    %c0_10 = arith.constant 0 : index
    %12 = vector.load %arg4[%c0_9, %c0_10] : memref<1x10xf32, #tpu.memory_space<vmem>>, vector<1x10xf32>
    %13 = vector.broadcast %12 : vector<1x10xf32> to vector<8x10xf32>
    %14 = arith.addf %11, %13 : vector<8x10xf32>
    %cst_11 = arith.constant 0.000000e+00 : f32
    %15 = vector.broadcast %cst_11 : f32 to vector<8x10xf32>
    %16 = arith.maximumf %14, %15 : vector<8x10xf32>
    %c0_12 = arith.constant 0 : index
    %c0_13 = arith.constant 0 : index
    %17 = vector.load %arg5[%c0_12, %c0_13] : memref<8x10xf32, #tpu.memory_space<vmem>>, vector<8x10xf32>
    tpu.vector_store %arg5[%c0_12, %c0_13], %16 {strides = array<i32>} : memref<8x10xf32, #tpu.memory_space<vmem>>, vector<8x10xf32>,
    return
  }
}

</mosaic_0001>

<llo_original>
// kernel: tpu_custom_call.1
$region0: #{tpu_custom_call.1}
  #allocation0 [shape = 'u32[]', space=smem, size = 0x4, offset = 0x4, fixed_abs, tag = 'smem constant byte address 0x4 - core index']
  #allocation1 [shape = 'u32[144,128]{1,0:T(1,128)}', space=vmem, size = 0x12000, scoped, tag = 'internal scratch']
  %s0 = inlined_call_operand.vmem [shape: f32[8,256], index: 0, kind: input, shape index: {}]
  %s1 = inlined_call_operand.hbm [shape: bf16[256,128], index: 1, kind: input, shape index: {}]
  %s2 = inlined_call_operand.vmem [shape: f32[1,128], index: 2, kind: input, shape index: {}]
  %s3 = inlined_call_operand.vmem [shape: bf16[128,10], index: 3, kind: input, shape index: {}]
  %s4 = inlined_call_operand.vmem [shape: f32[1,10], index: 4, kind: input, shape index: {}]
  %s5 = inlined_call_operand.hbm [shape: f32[8,10], index: 5, kind: output, shape index: {}]
  %s6 = sld [smem:[#allocation0]]
  $region34: #{tpu_custom_call.1} parent=0
    _
  %s8 = ssub.s32 1, %s6
  %s9 = scalar_select 0, %s8, %s6
  $region1: #{tpu_custom_call.1} parent=0
    #allocation2 [shape = 'u8[65536]{0}', space=vmem, size = 0x10000, scoped, tag = 'input window, operand 1, single buffered']
    #allocation3 [shape = 's32[1]{0}', space=sflag, size = 0x4, scoped, tag = 'scoped memory for tpu_custom_call.1']
    #allocation4 [shape = 's32[1]{0}', space=sflag, size = 0x4, scoped, tag = 'scoped memory for tpu_custom_call.1']
    #allocation5 [shape = 'u8[4096]{0}', space=vmem, size = 0x1000, scoped, tag = 'output window, operand 0, single buffered']
    %10 = vsyncpa [#allocation3], 0
    %11 = vsyncpa [#allocation4], 0
    // Predicated region
    $region2: #{tpu_custom_call.1} parent=1 // pred_check
      _
    $region3: #{tpu_custom_call.1} parent=1 // pred_check_branch
      %13 = sbr.rel (0) target = $region5
    $region4: #{tpu_custom_call.1} parent=1 // pred_region
      _
    $region5: #{tpu_custom_call.1} parent=1 // pred_fallthru
      _
    // Predicated region
    $region6: #{tpu_custom_call.1} parent=1 // pred_check
      _
    $region7: #{tpu_custom_call.1} parent=1 // pred_check_branch
      %15 = sbr.rel (0) target = $region9
    $region8: #{tpu_custom_call.1} parent=1 // pred_region
      %s17 = ssub.s32 2048, 2048
      %18 = vsyncadd [#allocation3], %s17
      %s19 = sshll.u32 [#allocation2], 4
      %s20 = int_to_ptr.vmem [resolvable:$true] %s19
      %25 = dma.hbm_to_vmem [thread:$0]  %s1, 2048, %s20, [#allocation3], 64, 64, 4
    $region9: #{tpu_custom_call.1} parent=1 // pred_fallthru
      _
    // Predicated region
    $region10: #{tpu_custom_call.1} parent=1 // pred_check
      _
    $region11: #{tpu_custom_call.1} parent=1 // pred_check_branch
      %27 = sbr.rel (0) target = $region13
    $region12: #{tpu_custom_call.1} parent=1 // pred_region
      _
    $region13: #{tpu_custom_call.1} parent=1 // pred_fallthru
      _
    // Predicated region
    $region14: #{tpu_custom_call.1} parent=1 // pred_check
      _
    $region15: #{tpu_custom_call.1} parent=1 // pred_check_branch
      %29 = sbr.rel (0) target = $region17
    $region16: #{tpu_custom_call.1} parent=1 // pred_region
      _
    $region17: #{tpu_custom_call.1} parent=1 // pred_fallthru
      _
    // Predicated region
    $region18: #{tpu_custom_call.1} parent=1 // pred_check
      _
    $region19: #{tpu_custom_call.1} parent=1 // pred_check_branch
      %31 = sbr.rel (0) target = $region21
    $region20: #{tpu_custom_call.1} parent=1 // pred_region
      _
    $region21: #{tpu_custom_call.1} parent=1 // pred_fallthru
      _
    // Predicated region
    $region22: #{tpu_custom_call.1} parent=1 // pred_check
      _
    $region23: #{tpu_custom_call.1} parent=1 // pred_check_branch
      %33 = sbr.rel (0) target = $region25
    $region24: #{tpu_custom_call.1} parent=1 // pred_region
      %34 = dma.done [#allocation3], 2048
    $region25: #{tpu_custom_call.1} parent=1 // pred_fallthru
      _
    %v36 = vld [vmem:[%s0] sm:$0xff]
    %v37 = vld [vmem:[%s0 + $0x8] sm:$0xff]
    %v38 = vpack.c.bf16 %v36, %v36
    %v39 = vpack.c.bf16 %v37, %v37
    %v40 = vld [vmem:[#allocation2] sm:$0xf]
    %v41 = vld [vmem:[#allocation2 + $0x4] sm:$0xf]
    %v42 = vld [vmem:[#allocation2 + $0x8] sm:$0xf]
    %v43 = vld [vmem:[#allocation2 + $0xc] sm:$0xf]
    %v44 = vld [vmem:[#allocation2 + $0x10] sm:$0xf]
    %v45 = vld [vmem:[#allocation2 + $0x14] sm:$0xf]
    %v46 = vld [vmem:[#allocation2 + $0x18] sm:$0xf]
    %v47 = vld [vmem:[#allocation2 + $0x1c] sm:$0xf]
    %v48 = vld [vmem:[#allocation2 + $0x20] sm:$0xf]
    %v49 = vld [vmem:[#allocation2 + $0x24] sm:$0xf]
    %v50 = vld [vmem:[#allocation2 + $0x28] sm:$0xf]
    %v51 = vld [vmem:[#allocation2 + $0x2c] sm:$0xf]
    %v52 = vld [vmem:[#allocation2 + $0x30] sm:$0xf]
    %v53 = vld [vmem:[#allocation2 + $0x34] sm:$0xf]
    %v54 = vld [vmem:[#allocation2 + $0x38] sm:$0xf]
    %v55 = vld [vmem:[#allocation2 + $0x3c] sm:$0xf]
    %v56 = vld [vmem:[#allocation2 + $0x40] sm:$0xf]
    %v57 = vld [vmem:[#allocation2 + $0x44] sm:$0xf]
    %v58 = vld [vmem:[#allocation2 + $0x48] sm:$0xf]
    %v59 = vld [vmem:[#allocation2 + $0x4c] sm:$0xf]
    %v60 = vld [vmem:[#allocation2 + $0x50] sm:$0xf]
    %v61 = vld [vmem:[#allocation2 + $0x54] sm:$0xf]
    %v62 = vld [vmem:[#allocation2 + $0x58] sm:$0xf]
    %v63 = vld [vmem:[#allocation2 + $0x5c] sm:$0xf]
    %v64 = vld [vmem:[#allocation2 + $0x60] sm:$0xf]
    %v65 = vld [vmem:[#allocation2 + $0x64] sm:$0xf]
    %v66 = vld [vmem:[#allocation2 + $0x68] sm:$0xf]
    %v67 = vld [vmem:[#allocation2 + $0x6c] sm:$0xf]
    %v68 = vld [vmem:[#allocation2 + $0x70] sm:$0xf]
    %v69 = vld [vmem:[#allocation2 + $0x74] sm:$0xf]
    %v70 = vld [vmem:[#allocation2 + $0x78] sm:$0xf]
    %v71 = vld [vmem:[#allocation2 + $0x7c] sm:$0xf]
    %v72 = vld [vmem:[%s2] sm:$0x1]
    %v74 = vlaneseq
    %v75 = vshrl.u32 %v74, 7
    %v76 = vsub.s32 0, %v75
    %v77 = vrot.slane %v72, %v76
    %v111 = vunpack.c.l.b16 %v40
    %v112 = vunpack.c.l.b16 %v41
    %v113 = vunpack.c.l.b16 %v42
    %v114 = vunpack.c.l.b16 %v43
    %v115 = vunpack.c.l.b16 %v44
    %v116 = vunpack.c.l.b16 %v45
    %v117 = vunpack.c.l.b16 %v46
    %v118 = vunpack.c.l.b16 %v47
    %v119 = vunpack.c.l.b16 %v48
    %v120 = vunpack.c.l.b16 %v49
    %v121 = vunpack.c.l.b16 %v50
    %v122 = vunpack.c.l.b16 %v51
    %v123 = vunpack.c.l.b16 %v52
    %v124 = vunpack.c.l.b16 %v53
    %v125 = vunpack.c.l.b16 %v54
    %v126 = vunpack.c.l.b16 %v55
    %v127 = vunpack.c.l.b16 %v56
    %v128 = vunpack.c.l.b16 %v57
    %v129 = vunpack.c.l.b16 %v58
    %v130 = vunpack.c.l.b16 %v59
    %v131 = vunpack.c.l.b16 %v60
    %v132 = vunpack.c.l.b16 %v61
    %v133 = vunpack.c.l.b16 %v62
    %v134 = vunpack.c.l.b16 %v63
    %v135 = vunpack.c.l.b16 %v64
    %v136 = vunpack.c.l.b16 %v65
    %v137 = vunpack.c.l.b16 %v66
    %v138 = vunpack.c.l.b16 %v67
    %v139 = vunpack.c.l.b16 %v68
    %v140 = vunpack.c.l.b16 %v69
    %v141 = vunpack.c.l.b16 %v70
    %v142 = vunpack.c.l.b16 %v71
    %v143 = vpack.c.b16 %v112, %v111
    %v144 = vpack.c.b16 %v114, %v113
    %v145 = vpack.c.b16 %v116, %v115
    %v146 = vpack.c.b16 %v118, %v117
    %v147 = vpack.c.b16 %v120, %v119
    %v148 = vpack.c.b16 %v122, %v121
    %v149 = vpack.c.b16 %v124, %v123
    %v150 = vpack.c.b16 %v126, %v125
    %v151 = vpack.c.b16 %v128, %v127
    %v152 = vpack.c.b16 %v130, %v129
    %v153 = vpack.c.b16 %v132, %v131
    %v154 = vpack.c.b16 %v134, %v133
    %v155 = vpack.c.b16 %v136, %v135
    %v156 = vpack.c.b16 %v138, %v137
    %v157 = vpack.c.b16 %v140, %v139
    %v158 = vpack.c.b16 %v142, %v141
    %175 = vmatprep.subr.bf16.mxu0 0
    %176 = vmatpush1.bf16.msra.mxu0 %v143
    %177 = vmatprep.subr.bf16.mxu0 0
    %178 = vmatpush1.bf16.msra.mxu0 %v144
    %179 = vmatprep.subr.bf16.mxu0 0
    %180 = vmatpush1.bf16.msra.mxu0 %v145
    %181 = vmatprep.subr.bf16.mxu0 0
    %182 = vmatpush1.bf16.msra.mxu0 %v146
    %183 = vmatprep.subr.bf16.mxu0 0
    %184 = vmatpush1.bf16.msra.mxu0 %v147
    %185 = vmatprep.subr.bf16.mxu0 0
    %186 = vmatpush1.bf16.msra.mxu0 %v148
    %187 = vmatprep.subr.bf16.mxu0 0
    %188 = vmatpush1.bf16.msra.mxu0 %v149
    %189 = vmatprep.subr.bf16.mxu0 0
    %190 = vmatpush1.bf16.msra.mxu0 %v150
    %191 = vmatprep.subr.bf16.mxu0 0
    %192 = vmatpush1.bf16.msra.mxu0 %v151
    %193 = vmatprep.subr.bf16.mxu0 0
    %194 = vmatpush1.bf16.msra.mxu0 %v152
    %195 = vmatprep.subr.bf16.mxu0 0
    %196 = vmatpush1.bf16.msra.mxu0 %v153
    %197 = vmatprep.subr.bf16.mxu0 0
    %198 = vmatpush1.bf16.msra.mxu0 %v154
    %199 = vmatprep.subr.bf16.mxu0 0
    %200 = vmatpush1.bf16.msra.mxu0 %v155
    %201 = vmatprep.subr.bf16.mxu0 0
    %202 = vmatpush1.bf16.msra.mxu0 %v156
    %203 = vmatprep.subr.bf16.mxu0 0
    %204 = vmatpush1.bf16.msra.mxu0 %v157
    %205 = vmatprep.subr.bf16.mxu0 0
    %206 = vmatpush1.bf16.msra.mxu0 %v158
    %207 = vmatprep.mubr.bf16.mxu0 %v39
    %208 = vmatmul.mubr.bf16.gmra.mrb[0].mxu0 %v38
    %v209 = vpop.f32.mrb[0].mxu0
    %v210 = vadd.f32 %v77, %v209
    %v211 = vpop.f32.mrb[0].mxu0
    %v212 = vpop.f32.mrb[0].mxu0
    %v213 = vpop.f32.mrb[0].mxu0
    %214 = vdwg.mxu0
    %v215 = vmax.f32 %v210, 0.0
    %v216 = vpack.c.bf16 %v215, %v215
    %v217 = vld [vmem:[%s3] sm:$0xf]
    %v218 = vld [vmem:[%s3 + $0x4] sm:$0xf]
    %v219 = vld [vmem:[%s3 + $0x8] sm:$0xf]
    %v220 = vld [vmem:[%s3 + $0xc] sm:$0xf]
    %v221 = vld [vmem:[%s3 + $0x10] sm:$0xf]
    %v222 = vld [vmem:[%s3 + $0x14] sm:$0xf]
    %v223 = vld [vmem:[%s3 + $0x18] sm:$0xf]
    %v224 = vld [vmem:[%s3 + $0x1c] sm:$0xf]
    %v225 = vld [vmem:[%s3 + $0x20] sm:$0xf]
    %v226 = vld [vmem:[%s3 + $0x24] sm:$0xf]
    %v227 = vld [vmem:[%s3 + $0x28] sm:$0xf]
    %v228 = vld [vmem:[%s3 + $0x2c] sm:$0xf]
    %v229 = vld [vmem:[%s3 + $0x30] sm:$0xf]
    %v230 = vld [vmem:[%s3 + $0x34] sm:$0xf]
    %v231 = vld [vmem:[%s3 + $0x38] sm:$0xf]
    %v232 = vld [vmem:[%s3 + $0x3c] sm:$0xf]
    %v233 = vld [vmem:[%s4] sm:$0x1]
    %v235 = vlaneseq
    %v236 = vshrl.u32 %v235, 7
    %v237 = vsub.s32 0, %v236
    %v238 = vrot.slane %v233, %v237
    %v256 = vunpack.c.l.b16 %v217
    %v257 = vunpack.c.l.b16 %v218
    %v258 = vunpack.c.l.b16 %v219
    %v259 = vunpack.c.l.b16 %v220
    %v260 = vunpack.c.l.b16 %v221
    %v261 = vunpack.c.l.b16 %v222
    %v262 = vunpack.c.l.b16 %v223
    %v263 = vunpack.c.l.b16 %v224
    %v264 = vunpack.c.l.b16 %v225
    %v265 = vunpack.c.l.b16 %v226
    %v266 = vunpack.c.l.b16 %v227
    %v267 = vunpack.c.l.b16 %v228
    %v268 = vunpack.c.l.b16 %v229
    %v269 = vunpack.c.l.b16 %v230
    %v270 = vunpack.c.l.b16 %v231
    %v271 = vunpack.c.l.b16 %v232
    %v272 = vpack.c.b16 %v257, %v256
    %v273 = vpack.c.b16 %v259, %v258
    %v274 = vpack.c.b16 %v261, %v260
    %v275 = vpack.c.b16 %v263, %v262
    %v276 = vpack.c.b16 %v265, %v264
    %v277 = vpack.c.b16 %v267, %v266
    %v278 = vpack.c.b16 %v269, %v268
    %v279 = vpack.c.b16 %v271, %v270
    %288 = vmatprep.subr.bf16.mxu0 0
    %289 = vmatpush1.bf16.msra.mxu0 %v272
    %290 = vmatprep.subr.bf16.mxu0 0
    %291 = vmatpush1.bf16.msra.mxu0 %v273
    %292 = vmatprep.subr.bf16.mxu0 0
    %293 = vmatpush1.bf16.msra.mxu0 %v274
    %294 = vmatprep.subr.bf16.mxu0 0
    %295 = vmatpush1.bf16.msra.mxu0 %v275
    %296 = vmatprep.subr.bf16.mxu0 0
    %297 = vmatpush1.bf16.msra.mxu0 %v276
    %298 = vmatprep.subr.bf16.mxu0 0
    %299 = vmatpush1.bf16.msra.mxu0 %v277
    %300 = vmatprep.subr.bf16.mxu0 0
    %301 = vmatpush1.bf16.msra.mxu0 %v278
    %302 = vmatprep.subr.bf16.mxu0 0
    %303 = vmatpush1.bf16.msra.mxu0 %v279
    %304 = vmatprep.subr.bf16.mxu0 0
    %305 = vmatpush1.bf16.msra.mxu0 0
    %306 = vmatprep.subr.bf16.mxu0 0
    %307 = vmatpush1.bf16.msra.mxu0 0
    %308 = vmatprep.subr.bf16.mxu0 0
    %309 = vmatpush1.bf16.msra.mxu0 0
    %310 = vmatprep.subr.bf16.mxu0 0
    %311 = vmatpush1.bf16.msra.mxu0 0
    %312 = vmatprep.subr.bf16.mxu0 0
    %313 = vmatpush1.bf16.msra.mxu0 0
    %314 = vmatprep.subr.bf16.mxu0 0
    %315 = vmatpush1.bf16.msra.mxu0 0
    %316 = vmatprep.subr.bf16.mxu0 0
    %317 = vmatpush1.bf16.msra.mxu0 0
    %318 = vmatprep.subr.bf16.mxu0 0
    %319 = vmatpush1.bf16.msra.mxu0 0
    %320 = vmatprep.mubr.bf16.mxu0 0
    %321 = vmatmul.mubr.bf16.gmra.mrb[0].mxu0 %v216
    %v322 = vpop.f32.mrb[0].mxu0
    %v323 = vadd.f32 %v238, %v322
    %v324 = vpop.f32.mrb[0].mxu0
    %v325 = vpop.f32.mrb[0].mxu0
    %v326 = vpop.f32.mrb[0].mxu0
    %327 = vdwg.mxu0
    %v328 = vmax.f32 %v323, 0.0
    %vm329 = vcmask 80896
    %330 = vst.msk [vmem:[#allocation5] sm:$0xff] %vm329, %v328
    // Predicated region
    $region26: #{tpu_custom_call.1} parent=1 // pred_check
      _
    $region27: #{tpu_custom_call.1} parent=1 // pred_check_branch
      %332 = sbr.rel (0) target = $region29
    $region28: #{tpu_custom_call.1} parent=1 // pred_region
      %s334 = ssub.s32 128, 128
      %335 = vsyncadd [#allocation4], %s334
      %s337 = sshll.u32 [#allocation5], 4
      %s338 = int_to_ptr.vmem [resolvable:$true] %s337
      %340 = dma.vmem_to_hbm [thread:$0]  %s338, 128, %s5, [#allocation4]
    $region29: #{tpu_custom_call.1} parent=1 // pred_fallthru
      _
    // Predicated region
    $region30: #{tpu_custom_call.1} parent=1 // pred_check
      _
    $region31: #{tpu_custom_call.1} parent=1 // pred_check_branch
      %342 = sbr.rel (0) target = $region33
    $region32: #{tpu_custom_call.1} parent=1 // pred_region
      %343 = dma.done [#allocation4], 128
    $region33: #{tpu_custom_call.1} parent=1 // pred_fallthru
      _
    %344 = vsyncpa [#allocation3], 1
    %345 = vsyncpa [#allocation4], 1

</llo_original>
